<compile_context>
chip_gen: v5e
topology: v5e:2x2
jax: 0.10.0
libtpu: 0.0.40
codegen_flags: <defaults>
</compile_context>

<pallas_src>
import functools

import jax
import jax.numpy as jnp
from jax import lax
from jax.experimental import pallas as pl
from jax.experimental.pallas import tpu as pltpu


def _hardswish(x):
    return x * jnp.clip(x + 3.0, 0.0, 6.0) * (1.0 / 6.0)


def _relu6(x):
    return jnp.clip(x, 0.0, 6.0)


def _round_up(n, m):
    return ((n + m - 1) // m) * m


def _block_kernel(x_ref, pk_ref, mask_ref, out_ref, *,
                  W, k, use_hswish, use_se, res_connect,
                  Cin, Cout, hidden, cred, seg):
    """One grid step = `b_blk` images.

    Layouts (channel-major, lane-dense):
      x_ref   : (b_blk, Cin+1, H*W)  last channel is a constant ones row
                                     (folds the expand-conv bias into the MXU matmul)
      pk_ref  : (max(hidden,Cout), CP) all small constants packed into one array;
                                     every segment starts on a 128-lane boundary
      mask_ref: (k*k, H*W)           {0,1} border masks for the roll-based depthwise conv
      out_ref : (b_blk, Cout, H*W)
    """
    act = _hardswish if use_hswish else _relu6
    f32 = jnp.float32
    HW = x_ref.shape[-1]
    p = (k - 1) // 2
    b_blk = x_ref.shape[0]
    center = p * k + p

    # ---- constants: one packed VMEM ref, static lane-aligned slices, loaded
    # once per grid step and reused for every image in the block ----
    c_w1, c_dw, c_b2, c_fc1, c_fc2, c_w3, c_b3 = seg
    w1a = pk_ref[:hidden, c_w1:c_w1 + Cin + 1]       # (hidden, Cin+1), bias folded
    dw = pk_ref[:hidden, c_dw:c_dw + k * k]          # (hidden, k*k)
    b2 = pk_ref[:hidden, c_b2:c_b2 + 1]              # (hidden, 1)
    w3 = pk_ref[:Cout, c_w3:c_w3 + hidden]           # (Cout, hidden)
    b3 = pk_ref[:Cout, c_b3:c_b3 + 1]                # (Cout, 1)
    if use_se:
        fc1 = pk_ref[:hidden, c_fc1:c_fc1 + cred]    # (hidden, cred)
        fc2t = pk_ref[:hidden, c_fc2:c_fc2 + cred]   # (hidden, cred)

    def process_image(b):
        x = x_ref[b]                                             # (Cin+1, HW)

        # -- 1x1 expand conv on the MXU (BN scale + bias folded into w1a) --
        h = act(jnp.dot(w1a, x, preferred_element_type=f32))     # (hidden, HW)

        # -- depthwise kxk conv, stride 1, 'same' padding (BN folded into dw) --
        # Spatial shifts are XLU lane-rolls of the flattened H*W axis; zero
        # padding comes from precomputed {0,1} border masks (no padded scratch).
        acc = dw[:, center:center + 1] * h
        for ky in range(k):
            for kx in range(k):
                if ky == p and kx == p:
                    continue
                d = (ky - p) * W + (kx - p)                      # flat source offset
                tap = ky * k + kx
                shifted = pltpu.roll(h, shift=(-d) % HW, axis=1)
                acc = acc + dw[:, tap:tap + 1] * (
                    shifted * mask_ref[tap:tap + 1, :])
        s = act(acc + b2)                                        # (hidden, HW)

        # -- squeeze-and-excite (tiny FCs stay on the VPU/XLU) --
        if use_se:
            pooled = jnp.mean(s, axis=1, keepdims=True)                    # (hidden,1)
            z = jnp.maximum(
                jnp.sum(fc1 * pooled, axis=0, keepdims=True), 0.0)         # (1,cred)
            g = jax.nn.sigmoid(
                jnp.sum(fc2t * z, axis=1, keepdims=True))                  # (hidden,1)
            s = s * g

        # -- 1x1 project conv on the MXU (BN scale folded into w3) + bias --
        y = jnp.dot(w3, s, preferred_element_type=f32) + b3                # (Cout,HW)

        if res_connect:
            y = y + x[:Cin, :]

        out_ref[b] = y                                           # lane-dense store

    if b_blk == 1:
        process_image(0)          # static path (no loop overhead)
    else:
        # scf.for bounds per-image live ranges (avoids vreg spills at larger b_blk).
        pl.loop(0, b_blk)(process_image)


def inverted_residual_se_block(x_nchw, params, *, stride, kernel_size,
                               use_hswish, use_se, batch_block=None):
    # TODO(synk): stride > 1 depthwise subsampling is not implemented in-kernel;
    # this covers the stride == 1 (residual-capable) configuration.
    assert stride == 1
    B, Cin, H, W = x_nchw.shape
    hidden = params["w1"].shape[1]
    Cout = params["w3"].shape[1]
    cred = params["fc1"].shape[1]
    k = kernel_size
    p = (k - 1) // 2
    HW = H * W
    res_connect = (stride == 1 and Cin == Cout)
    f32 = jnp.float32

    # --- batch tiling: several images per grid step amortize the ~600-cycle
    # per-step pipeline overhead.  Default keeps >=2 grid steps so v7x's
    # second TensorCore is used; on single-TC v5e/v6e pass batch_block=B.
    if batch_block is None:
        batch_block = min(max(1, B // 2), 4)
    b_blk = max(d for d in range(1, min(batch_block, B) + 1) if B % d == 0)
    grid = (B // b_blk,)

    # --- channel-major, lane-dense input; append a constant ones channel so
    # the expand-conv bias rides the MXU matmul for free.
    x_cm = x_nchw.reshape(B, Cin, HW).astype(f32)
    x_aug = jnp.concatenate([x_cm, jnp.ones((B, 1, HW), f32)], axis=1)

    # --- fold BatchNorm (inference) scales into the conv weights at trace time ---
    w1_f = (params["w1"] * params["s1"][None, :]).T.astype(f32)        # (hidden, Cin)
    w1_aug = jnp.concatenate(
        [w1_f, params["b1"].reshape(hidden, 1).astype(f32)], axis=1)   # (hidden, Cin+1)
    dw_f = (params["dw"] * params["s2"][None, :]).T.astype(f32)        # (hidden, k*k)
    b2_c = params["b2"].reshape(hidden, 1).astype(f32)
    fc1 = params["fc1"].astype(f32)                                    # (hidden, cred)
    fc2_t = params["fc2"].T.astype(f32)                                # (hidden, cred)
    w3_f = (params["w3"] * params["s3"][None, :]).T.astype(f32)        # (Cout, hidden)
    b3_c = params["b3"].reshape(Cout, 1).astype(f32)

    # --- pack all small constants into ONE array (one DMA descriptor instead
    # of nine).  Segments start on 128-lane boundaries -> in-kernel slices are
    # vreg-aligned; rows are padded to max(hidden, Cout).
    R = max(hidden, Cout)
    pieces = [w1_aug, dw_f, b2_c, fc1, fc2_t, w3_f, b3_c]
    seg, cols, off = [], [], 0
    for a in pieces:
        seg.append(off)
        width = _round_up(a.shape[1], 128)
        cols.append(jnp.pad(a, ((0, R - a.shape[0]), (0, width - a.shape[1]))))
        off += width
    pk = jnp.concatenate(cols, axis=1).astype(f32)                     # (R, off)

    # --- per-tap boundary masks for the roll-based depthwise conv ---
    ys = jnp.arange(HW, dtype=jnp.int32) // W
    xs = jnp.arange(HW, dtype=jnp.int32) % W
    rows = []
    for ky in range(k):
        for kx in range(k):
            rows.append((ys + (ky - p) >= 0) & (ys + (ky - p) < H) &
                        (xs + (kx - p) >= 0) & (xs + (kx - p) < W))
    mask = jnp.stack(rows, axis=0).astype(f32)                         # (k*k, HW)

    kernel = functools.partial(
        _block_kernel, W=W, k=k, use_hswish=use_hswish, use_se=use_se,
        res_connect=res_connect, Cin=Cin, Cout=Cout, hidden=hidden,
        cred=cred, seg=tuple(seg))

    out = pl.pallas_call(
        kernel,
        out_shape=jax.ShapeDtypeStruct((B, Cout, HW), f32),
        grid=grid,
        in_specs=[
            pl.BlockSpec((b_blk, Cin + 1, HW), lambda g: (g, 0, 0)),   # x (lane-dense)
            pl.BlockSpec(pk.shape, lambda g: (0, 0)),                  # packed constants
            pl.BlockSpec((k * k, HW), lambda g: (0, 0)),               # border masks
        ],
        out_specs=pl.BlockSpec((b_blk, Cout, HW), lambda g: (g, 0, 0)),
        compiler_params=pltpu.CompilerParams(
            dimension_semantics=("parallel",)),   # batch tiles across TCs on v7x
    )(x_aug, pk, mask)

    return out.reshape(B, Cout, H, W)   # pure reshape back to NCHW


def reference(x, params, *, stride, kernel_size, use_hswish, use_se):
    """Pure-JAX/XLA reference of the same forward pass (NCHW, high precision)."""
    act = _hardswish if use_hswish else _relu6
    k = kernel_size
    p = (k - 1) // 2
    hidden = params["w1"].shape[1]
    hi = lax.Precision.HIGHEST

    h = jnp.einsum('bchw,cd->bdhw', x, params["w1"], precision=hi)
    h = act(h * params["s1"].reshape(1, -1, 1, 1)
            + params["b1"].reshape(1, -1, 1, 1))

    dw = jnp.transpose(params["dw"].reshape(k, k, hidden),
                       (2, 0, 1))[:, None, :, :]          # (hidden,1,k,k)
    s = lax.conv_general_dilated(
        h, dw, window_strides=(stride, stride), padding=((p, p), (p, p)),
        dimension_numbers=('NCHW', 'OIHW', 'NCHW'),
        feature_group_count=hidden, precision=hi)
    s = act(s * params["s2"].reshape(1, -1, 1, 1)
            + params["b2"].reshape(1, -1, 1, 1))

    if use_se:
        pooled = jnp.mean(s, axis=(2, 3))                  # (B, hidden)
        z = jnp.maximum(jnp.dot(pooled, params["fc1"], precision=hi), 0.0)
        g = jax.nn.sigmoid(jnp.dot(z, params["fc2"], precision=hi))
        s = s * g[:, :, None, None]

    y = jnp.einsum('bchw,cd->bdhw', s, params["w3"], precision=hi)
    y = y * params["s3"].reshape(1, -1, 1, 1) + params["b3"].reshape(1, -1, 1, 1)
    if stride == 1 and x.shape[1] == y.shape[1]:
        y = y + x
    return y


if __name__ == "__main__":
    # Config: in_ch=8, out_ch=8, stride=1, kernel=3, expandSize=32, se=1, nl=1
    B, Cin, H, W = 2, 8, 16, 16
    Cout, stride, k, hidden, se, nl = 8, 1, 3, 32, 1, 1
    cred = max(hidden // 16, 1)

    key = jax.random.PRNGKey(0)
    keys = jax.random.split(key, 10)

    def bn_params(kk, c):
        k1, k2, k3, k4 = jax.random.split(kk, 4)
        gamma = jax.random.uniform(k1, (c,), minval=0.5, maxval=1.5)
        beta = 0.1 * jax.random.normal(k2, (c,))
        mean = 0.1 * jax.random.normal(k3, (c,))
        var = jax.random.uniform(k4, (c,), minval=0.5, maxval=1.5)
        scale = gamma / jnp.sqrt(var + 1e-5)
        bias = beta - mean * scale
        return scale.astype(jnp.float32), bias.astype(jnp.float32)

    s1, b1 = bn_params(keys[0], hidden)
    s2, b2 = bn_params(keys[1], hidden)
    s3, b3 = bn_params(keys[2], Cout)

    params = dict(
        w1=(0.3 * jax.random.normal(keys[3], (Cin, hidden))).astype(jnp.float32),
        dw=(0.3 * jax.random.normal(keys[4], (k * k, hidden))).astype(jnp.float32),
        fc1=(0.3 * jax.random.normal(keys[5], (hidden, cred))).astype(jnp.float32),
        fc2=(0.3 * jax.random.normal(keys[6], (cred, hidden))).astype(jnp.float32),
        w3=(0.3 * jax.random.normal(keys[7], (hidden, Cout))).astype(jnp.float32),
        s1=s1, b1=b1, s2=s2, b2=b2, s3=s3, b3=b3,
    )

    x = jax.random.normal(keys[8], (B, Cin, H, W), dtype=jnp.float32)

    fn = jax.jit(functools.partial(
        inverted_residual_se_block, stride=stride, kernel_size=k,
        use_hswish=(nl == 1), use_se=(se == 1)))
    out = jax.block_until_ready(fn(x, params))

    ref = reference(x, params, stride=stride, kernel_size=k,
                    use_hswish=(nl == 1), use_se=(se == 1))

    assert out.shape == (B, Cout, H, W)
    max_err = float(jnp.max(jnp.abs(out - ref)))
    assert jnp.allclose(out, ref, atol=2e-3, rtol=2e-3), max_err
    print("KERNEL_OK")
</pallas_src>

<mosaic_0001>
module attributes {stable_mosaic.version = 11 : i64} {
  func.func @_block_kernel(%arg0: i32, %arg1: memref<1x9x256xf32, #tpu.memory_space<vmem>>, %arg2: memref<32x896xf32, #tpu.memory_space<vmem>>, %arg3: memref<9x256xf32, #tpu.memory_space<vmem>>, %arg4: memref<1x8x256xf32, #tpu.memory_space<vmem>>) attributes {dimension_semantics = [#tpu.dimension_semantics<parallel>], iteration_bounds = array<i64: 2>, scalar_prefetch = 0 : i64, scratch_operands = 0 : i64, tpu.core_type = #tpu.core_type<tc>, window_params = [{transform_indices = @transform_0, window_bounds = array<i64: 1, 9, 256>}, {pipeline_mode = #tpu.pipeline_mode<synchronous>, transform_indices = @transform_1, window_bounds = array<i64: 32, 896>}, {pipeline_mode = #tpu.pipeline_mode<synchronous>, transform_indices = @transform_2, window_bounds = array<i64: 9, 256>}, {transform_indices = @transform_3, window_bounds = array<i64: 1, 8, 256>}]} {
    %c0 = arith.constant 0 : index
    %c0_0 = arith.constant 0 : index
    %0 = vector.load %arg2[%c0, %c0_0] : memref<32x896xf32, #tpu.memory_space<vmem>>, vector<32x9xf32>
    %c0_1 = arith.constant 0 : index
    %c128 = arith.constant 128 : index
    %1 = vector.load %arg2[%c0_1, %c128] : memref<32x896xf32, #tpu.memory_space<vmem>>, vector<32x9xf32>
    %c0_2 = arith.constant 0 : index
    %c256 = arith.constant 256 : index
    %2 = vector.load %arg2[%c0_2, %c256] : memref<32x896xf32, #tpu.memory_space<vmem>>, vector<32x1xf32>
    %c0_3 = arith.constant 0 : index
    %c640 = arith.constant 640 : index
    %3 = vector.load %arg2[%c0_3, %c640] : memref<32x896xf32, #tpu.memory_space<vmem>>, vector<8x32xf32>
    %c0_4 = arith.constant 0 : index
    %c768 = arith.constant 768 : index
    %4 = vector.load %arg2[%c0_4, %c768] : memref<32x896xf32, #tpu.memory_space<vmem>>, vector<8x1xf32>
    %c0_5 = arith.constant 0 : index
    %c384 = arith.constant 384 : index
    %5 = vector.load %arg2[%c0_5, %c384] : memref<32x896xf32, #tpu.memory_space<vmem>>, vector<32x2xf32>
    %c0_6 = arith.constant 0 : index
    %c512 = arith.constant 512 : index
    %6 = vector.load %arg2[%c0_6, %c512] : memref<32x896xf32, #tpu.memory_space<vmem>>, vector<32x2xf32>
    %c0_7 = arith.constant 0 : index
    %c0_8 = arith.constant 0 : index
    %c0_9 = arith.constant 0 : index
    %7 = vector.load %arg1[%c0_7, %c0_8, %c0_9] : memref<1x9x256xf32, #tpu.memory_space<vmem>>, vector<1x9x256xf32>
    %8 = vector.shape_cast %7 : vector<1x9x256xf32> to vector<9x256xf32>
    %cst = arith.constant dense<0.000000e+00> : vector<32x256xf32>
    %9 = tpu.matmul %0, %8, %cst {dimension_numbers = #tpu.dot_dimension_numbers<[1], [0], [0], [1], [0, 0, 1, 1], [], []>} : vector<32x9xf32>, vector<9x256xf32>, vector<32x256xf32> -> vector<32x256xf32>
    %cst_10 = arith.constant 3.000000e+00 : f32
    %10 = vector.broadcast %cst_10 : f32 to vector<32x256xf32>
    %11 = arith.addf %9, %10 : vector<32x256xf32>
    %cst_11 = arith.constant 0.000000e+00 : f32
    %cst_12 = arith.constant 6.000000e+00 : f32
    %12 = vector.broadcast %cst_11 : f32 to vector<32x256xf32>
    %13 = arith.maximumf %12, %11 : vector<32x256xf32>
    %14 = vector.broadcast %cst_12 : f32 to vector<32x256xf32>
    %15 = arith.minimumf %14, %13 : vector<32x256xf32>
    %16 = arith.mulf %9, %15 : vector<32x256xf32>
    %cst_13 = arith.constant 0.166666672 : f32
    %17 = vector.broadcast %cst_13 : f32 to vector<32x256xf32>
    %18 = arith.mulf %16, %17 : vector<32x256xf32>
    %19 = vector.extract_strided_slice %1 {offsets = [0, 4], sizes = [32, 1], strides = [1, 1]} : vector<32x9xf32> to vector<32x1xf32>
    %20 = vector.broadcast %19 : vector<32x1xf32> to vector<32x256xf32>
    %21 = arith.mulf %20, %18 : vector<32x256xf32>
    %c17_i32 = arith.constant 17 : i32
    %22 = tpu.dynamic_rotate %18 by %c17_i32 dim 1 : vector<32x256xf32>, i32 -> vector<32x256xf32>
    %23 = vector.extract_strided_slice %1 {offsets = [0, 0], sizes = [32, 1], strides = [1, 1]} : vector<32x9xf32> to vector<32x1xf32>
    %c0_14 = arith.constant 0 : index
    %c0_15 = arith.constant 0 : index
    %24 = vector.load %arg3[%c0_14, %c0_15] : memref<9x256xf32, #tpu.memory_space<vmem>>, vector<1x256xf32>
    %25 = vector.broadcast %24 : vector<1x256xf32> to vector<32x256xf32>
    %26 = arith.mulf %22, %25 : vector<32x256xf32>
    %27 = vector.broadcast %23 : vector<32x1xf32> to vector<32x256xf32>
    %28 = arith.mulf %27, %26 : vector<32x256xf32>
    %29 = arith.addf %21, %28 : vector<32x256xf32>
    %c16_i32 = arith.constant 16 : i32
    %30 = tpu.dynamic_rotate %18 by %c16_i32 dim 1 : vector<32x256xf32>, i32 -> vector<32x256xf32>
    %31 = vector.extract_strided_slice %1 {offsets = [0, 1], sizes = [32, 1], strides = [1, 1]} : vector<32x9xf32> to vector<32x1xf32>
    %c1 = arith.constant 1 : index
    %c0_16 = arith.constant 0 : index
    %32 = vector.load %arg3[%c1, %c0_16] : memref<9x256xf32, #tpu.memory_space<vmem>>, vector<1x256xf32>
    %33 = vector.broadcast %32 : vector<1x256xf32> to vector<32x256xf32>
    %34 = arith.mulf %30, %33 : vector<32x256xf32>
    %35 = vector.broadcast %31 : vector<32x1xf32> to vector<32x256xf32>
    %36 = arith.mulf %35, %34 : vector<32x256xf32>
    %37 = arith.addf %29, %36 : vector<32x256xf32>
    %c15_i32 = arith.constant 15 : i32
    %38 = tpu.dynamic_rotate %18 by %c15_i32 dim 1 : vector<32x256xf32>, i32 -> vector<32x256xf32>
    %39 = vector.extract_strided_slice %1 {offsets = [0, 2], sizes = [32, 1], strides = [1, 1]} : vector<32x9xf32> to vector<32x1xf32>
    %c2 = arith.constant 2 : index
    %c0_17 = arith.constant 0 : index
    %40 = vector.load %arg3[%c2, %c0_17] : memref<9x256xf32, #tpu.memory_space<vmem>>, vector<1x256xf32>
    %41 = vector.broadcast %40 : vector<1x256xf32> to vector<32x256xf32>
    %42 = arith.mulf %38, %41 : vector<32x256xf32>
    %43 = vector.broadcast %39 : vector<32x1xf32> to vector<32x256xf32>
    %44 = arith.mulf %43, %42 : vector<32x256xf32>
    %45 = arith.addf %37, %44 : vector<32x256xf32>
    %c1_i32 = arith.constant 1 : i32
    %46 = tpu.dynamic_rotate %18 by %c1_i32 dim 1 : vector<32x256xf32>, i32 -> vector<32x256xf32>
    %47 = vector.extract_strided_slice %1 {offsets = [0, 3], sizes = [32, 1], strides = [1, 1]} : vector<32x9xf32> to vector<32x1xf32>
    %c3 = arith.constant 3 : index
    %c0_18 = arith.constant 0 : index
    %48 = vector.load %arg3[%c3, %c0_18] : memref<9x256xf32, #tpu.memory_space<vmem>>, vector<1x256xf32>
    %49 = vector.broadcast %48 : vector<1x256xf32> to vector<32x256xf32>
    %50 = arith.mulf %46, %49 : vector<32x256xf32>
    %51 = vector.broadcast %47 : vector<32x1xf32> to vector<32x256xf32>
    %52 = arith.mulf %51, %50 : vector<32x256xf32>
    %53 = arith.addf %45, %52 : vector<32x256xf32>
    %c255_i32 = arith.constant 255 : i32
    %54 = tpu.dynamic_rotate %18 by %c255_i32 dim 1 : vector<32x256xf32>, i32 -> vector<32x256xf32>
    %55 = vector.extract_strided_slice %1 {offsets = [0, 5], sizes = [32, 1], strides = [1, 1]} : vector<32x9xf32> to vector<32x1xf32>
    %c5 = arith.constant 5 : index
    %c0_19 = arith.constant 0 : index
    %56 = vector.load %arg3[%c5, %c0_19] : memref<9x256xf32, #tpu.memory_space<vmem>>, vector<1x256xf32>
    %57 = vector.broadcast %56 : vector<1x256xf32> to vector<32x256xf32>
    %58 = arith.mulf %54, %57 : vector<32x256xf32>
    %59 = vector.broadcast %55 : vector<32x1xf32> to vector<32x256xf32>
    %60 = arith.mulf %59, %58 : vector<32x256xf32>
    %61 = arith.addf %53, %60 : vector<32x256xf32>
    %c241_i32 = arith.constant 241 : i32
    %62 = tpu.dynamic_rotate %18 by %c241_i32 dim 1 : vector<32x256xf32>, i32 -> vector<32x256xf32>
    %63 = vector.extract_strided_slice %1 {offsets = [0, 6], sizes = [32, 1], strides = [1, 1]} : vector<32x9xf32> to vector<32x1xf32>
    %c6 = arith.constant 6 : index
    %c0_20 = arith.constant 0 : index
    %64 = vector.load %arg3[%c6, %c0_20] : memref<9x256xf32, #tpu.memory_space<vmem>>, vector<1x256xf32>
    %65 = vector.broadcast %64 : vector<1x256xf32> to vector<32x256xf32>
    %66 = arith.mulf %62, %65 : vector<32x256xf32>
    %67 = vector.broadcast %63 : vector<32x1xf32> to vector<32x256xf32>
    %68 = arith.mulf %67, %66 : vector<32x256xf32>
    %69 = arith.addf %61, %68 : vector<32x256xf32>
    %c240_i32 = arith.constant 240 : i32
    %70 = tpu.dynamic_rotate %18 by %c240_i32 dim 1 : vector<32x256xf32>, i32 -> vector<32x256xf32>
    %71 = vector.extract_strided_slice %1 {offsets = [0, 7], sizes = [32, 1], strides = [1, 1]} : vector<32x9xf32> to vector<32x1xf32>
    %c7 = arith.constant 7 : index
    %c0_21 = arith.constant 0 : index
    %72 = vector.load %arg3[%c7, %c0_21] : memref<9x256xf32, #tpu.memory_space<vmem>>, vector<1x256xf32>
    %73 = vector.broadcast %72 : vector<1x256xf32> to vector<32x256xf32>
    %74 = arith.mulf %70, %73 : vector<32x256xf32>
    %75 = vector.broadcast %71 : vector<32x1xf32> to vector<32x256xf32>
    %76 = arith.mulf %75, %74 : vector<32x256xf32>
    %77 = arith.addf %69, %76 : vector<32x256xf32>
    %c239_i32 = arith.constant 239 : i32
    %78 = tpu.dynamic_rotate %18 by %c239_i32 dim 1 : vector<32x256xf32>, i32 -> vector<32x256xf32>
    %79 = vector.extract_strided_slice %1 {offsets = [0, 8], sizes = [32, 1], strides = [1, 1]} : vector<32x9xf32> to vector<32x1xf32>
    %c8 = arith.constant 8 : index
    %c0_22 = arith.constant 0 : index
    %80 = vector.load %arg3[%c8, %c0_22] : memref<9x256xf32, #tpu.memory_space<vmem>>, vector<1x256xf32>
    %81 = vector.broadcast %80 : vector<1x256xf32> to vector<32x256xf32>
    %82 = arith.mulf %78, %81 : vector<32x256xf32>
    %83 = vector.broadcast %79 : vector<32x1xf32> to vector<32x256xf32>
    %84 = arith.mulf %83, %82 : vector<32x256xf32>
    %85 = arith.addf %77, %84 : vector<32x256xf32>
    %86 = vector.broadcast %2 : vector<32x1xf32> to vector<32x256xf32>
    %87 = arith.addf %85, %86 : vector<32x256xf32>
    %cst_23 = arith.constant 3.000000e+00 : f32
    %88 = vector.broadcast %cst_23 : f32 to vector<32x256xf32>
    %89 = arith.addf %87, %88 : vector<32x256xf32>
    %cst_24 = arith.constant 0.000000e+00 : f32
    %cst_25 = arith.constant 6.000000e+00 : f32
    %90 = vector.broadcast %cst_24 : f32 to vector<32x256xf32>
    %91 = arith.maximumf %90, %89 : vector<32x256xf32>
    %92 = vector.broadcast %cst_25 : f32 to vector<32x256xf32>
    %93 = arith.minimumf %92, %91 : vector<32x256xf32>
    %94 = arith.mulf %87, %93 : vector<32x256xf32>
    %cst_26 = arith.constant 0.166666672 : f32
    %95 = vector.broadcast %cst_26 : f32 to vector<32x256xf32>
    %96 = arith.mulf %94, %95 : vector<32x256xf32>
    %cst_27 = arith.constant dense<0.000000e+00> : vector<32xf32>
    %97 = vector.multi_reduction <add>, %96, %cst_27 [1] : vector<32x256xf32> to vector<32xf32>
    %98 = vector.shape_cast %97 : vector<32xf32> to vector<32x1xf32>
    %cst_28 = arith.constant 2.560000e+02 : f32
    %99 = vector.broadcast %cst_28 : f32 to vector<32x1xf32>
    %100 = arith.divf %98, %99 : vector<32x1xf32>
    %101 = vector.broadcast %100 : vector<32x1xf32> to vector<32x2xf32>
    %102 = arith.mulf %5, %101 : vector<32x2xf32>
    %cst_29 = arith.constant dense<0.000000e+00> : vector<2xf32>
    %103 = vector.multi_reduction <add>, %102, %cst_29 [0] : vector<32x2xf32> to vector<2xf32>
    %104 = vector.shape_cast %103 : vector<2xf32> to vector<1x2xf32>
    %cst_30 = arith.constant 0.000000e+00 : f32
    %105 = vector.broadcast %cst_30 : f32 to vector<1x2xf32>
    %106 = arith.maximumf %104, %105 : vector<1x2xf32>
    %107 = vector.broadcast %106 : vector<1x2xf32> to vector<32x2xf32>
    %108 = arith.mulf %6, %107 : vector<32x2xf32>
    %cst_31 = arith.constant dense<0.000000e+00> : vector<32xf32>
    %109 = vector.multi_reduction <add>, %108, %cst_31 [1] : vector<32x2xf32> to vector<32xf32>
    %110 = vector.shape_cast %109 : vector<32xf32> to vector<32x1xf32>
    %111 = arith.negf %110 : vector<32x1xf32>
    %112 = math.exp %111 : vector<32x1xf32>
    %cst_32 = arith.constant 1.000000e+00 : f32
    %113 = vector.broadcast %cst_32 : f32 to vector<32x1xf32>
    %114 = arith.addf %113, %112 : vector<32x1xf32>
    %115 = arith.divf %113, %114 : vector<32x1xf32>
    %116 = vector.broadcast %115 : vector<32x1xf32> to vector<32x256xf32>
    %117 = arith.mulf %96, %116 : vector<32x256xf32>
    %cst_33 = arith.constant dense<0.000000e+00> : vector<8x256xf32>
    %118 = tpu.matmul %3, %117, %cst_33 {dimension_numbers = #tpu.dot_dimension_numbers<[1], [0], [0], [1], [0, 0, 1, 1], [], []>} : vector<8x32xf32>, vector<32x256xf32>, vector<8x256xf32> -> vector<8x256xf32>
    %119 = vector.broadcast %4 : vector<8x1xf32> to vector<8x256xf32>
    %120 = arith.addf %118, %119 : vector<8x256xf32>
    %121 = vector.extract_strided_slice %8 {offsets = [0, 0], sizes = [8, 256], strides = [1, 1]} : vector<9x256xf32> to vector<8x256xf32>
    %122 = arith.addf %120, %121 : vector<8x256xf32>
    %c0_34 = arith.constant 0 : index
    %c0_35 = arith.constant 0 : index
    %c0_36 = arith.constant 0 : index
    %123 = vector.load %arg4[%c0_34, %c0_35, %c0_36] : memref<1x8x256xf32, #tpu.memory_space<vmem>>, vector<1x8x256xf32>
    %124 = vector.shape_cast %123 : vector<1x8x256xf32> to vector<8x256xf32>
    %125 = vector.shape_cast %122 : vector<8x256xf32> to vector<1x8x256xf32>
    tpu.vector_store %arg4[%c0_34, %c0_35, %c0_36], %125 {strides = array<i32>} : memref<1x8x256xf32, #tpu.memory_space<vmem>>, vector<1x8x256xf32>,
    return
  }
  func.func @transform_0(%arg0: i32) -> (i32, i32, i32) {
    %c0_i32 = arith.constant 0 : i32
    %c0_i32_0 = arith.constant 0 : i32
    %c0_i32_1 = arith.constant 0 : i32
    return %arg0, %c0_i32, %c0_i32_0 : i32, i32, i32
  }
  func.func @transform_1(%arg0: i32) -> (i32, i32) {
    %c0_i32 = arith.constant 0 : i32
    %c0_i32_0 = arith.constant 0 : i32
    %c0_i32_1 = arith.constant 0 : i32
    return %c0_i32, %c0_i32_0 : i32, i32
  }
  func.func @transform_2(%arg0: i32) -> (i32, i32) {
    %c0_i32 = arith.constant 0 : i32
    %c0_i32_0 = arith.constant 0 : i32
    %c0_i32_1 = arith.constant 0 : i32
    return %c0_i32, %c0_i32_0 : i32, i32
  }
  func.func @transform_3(%arg0: i32) -> (i32, i32, i32) {
    %c0_i32 = arith.constant 0 : i32
    %c0_i32_0 = arith.constant 0 : i32
    %c0_i32_1 = arith.constant 0 : i32
    return %arg0, %c0_i32, %c0_i32_0 : i32, i32, i32
  }
}

</mosaic_0001>

<llo_original>
// kernel: inverted_residual_se_block.1
$region0: #{inverted_residual_se_block.1}
  #allocation0 [shape = 'u32[]', space=smem, size = 0x4, offset = 0x4, fixed_abs, tag = 'smem constant byte address 0x4 - core index']
  #allocation1 [shape = 'u32[72,128]{1,0:T(1,128)}', space=vmem, size = 0x9000, scoped, tag = 'internal scratch']
  %s0 = inlined_call_operand.vmem [shape: f32[2,9,256], index: 0, kind: input, shape index: {}]
  %s1 = inlined_call_operand.vmem [shape: f32[32,896], index: 1, kind: input, shape index: {}]
  %s2 = inlined_call_operand.vmem [shape: f32[9,256], index: 2, kind: input, shape index: {}]
  %s3 = inlined_call_operand.vmem [shape: f32[2,8,256], index: 3, kind: output, shape index: {}]
  %s4 = sld [smem:[#allocation0]]
  $region45: #{inverted_residual_se_block.1} parent=0
    _
  %s6 = ssub.s32 1, %s4
  %s7 = scalar_select 0, %s6, %s4
  loop: start=0, step=1, limit=4
  $region2: #{inverted_residual_se_block.1} parent=0 // loop_pre_header
    _
  $region3: #{inverted_residual_se_block.1} parent=0 // loop_header
    %s9 = sphi 0, %s13
    %p10 = scmp.ge.s32.totalorder %s9, 4
    %s19 = sphi 0, %s21
    %s22 = sphi 0, %s19
    %s23 = sphi 0, %s22
    %s39 = sphi 0, %s23
    %s43 = sphi 0, %s43
    %s45 = sphi 0, %s43
    %s46 = sphi 0, %s45
    %s60 = sphi 0, %s46
    %s64 = sphi 0, %s64
    %s66 = sphi 0, %s64
    %s67 = sphi 0, %s66
    %s81 = sphi 0, %s67
    %s87 = sphi 0, %s89
    %s90 = sphi 0, %s87
    %s91 = sphi 0, %s90
    %s107 = sphi 0, %s91
  $region4: #{inverted_residual_se_block.1} parent=0 // loop_header_branch
    %12 = sbr.rel (%p10) target = $region8
  $region5: #{inverted_residual_se_block.1} parent=0 // loop_body
    %s14 = ssub.s32 %s9, 1
    %s15 = ssub.s32 %s9, 2
    %s16 = sadd.s32 %s9, 1
    %s17 = ssub.s32 %s9, %s16
    %p18 = scmp.eq.s32.totalorder %s17, 0
    %s20 = sadd.s32 %s19, 1
    %s21 = scalar_select %p18, %s19, %s20
    %p24 = pneg %p18
    %p25 = scmp.eq.s32.totalorder %s9, 1
    %p26 = por %p24, %p25
    %p27 = scmp.ne.s32.totalorder %s19, %s22
    %p28 = scmp.eq.s32.totalorder %s9, 0
    %p29 = por %p27, %p28
    %p30 = scmp.ne.s32.totalorder %s19, %s22
    %p31 = scmp.eq.s32.totalorder %s14, 1
    %p32 = por %p30, %p31
    %p33 = scmp.ne.s32.totalorder %s22, %s23
    %p34 = scmp.eq.s32.totalorder %s14, 0
    %p35 = por %p33, %p34
    %p36 = scmp.ne.s32.totalorder %s22, %s23
    %p37 = scmp.eq.s32.totalorder %s15, 1
    %p38 = por %p36, %p37
    %p40 = scmp.ne.s32.totalorder %s23, %s39
    %p41 = scmp.eq.s32.totalorder %s15, 0
    %p42 = por %p40, %p41
    %s44 = sadd.s32 %s43, 1
    %p47 = scmp.eq.s32.totalorder %s9, 1
    %p48 = scmp.ne.s32.totalorder %s43, %s45
    %p49 = scmp.eq.s32.totalorder %s9, 0
    %p50 = por %p48, %p49
    %p51 = scmp.ne.s32.totalorder %s43, %s45
    %p52 = scmp.eq.s32.totalorder %s14, 1
    %p53 = por %p51, %p52
    %p54 = scmp.ne.s32.totalorder %s45, %s46
    %p55 = scmp.eq.s32.totalorder %s14, 0
    %p56 = por %p54, %p55
    %p57 = scmp.ne.s32.totalorder %s45, %s46
    %p58 = scmp.eq.s32.totalorder %s15, 1
    %p59 = por %p57, %p58
    %p61 = scmp.ne.s32.totalorder %s46, %s60
    %p62 = scmp.eq.s32.totalorder %s15, 0
    %p63 = por %p61, %p62
    %s65 = sadd.s32 %s64, 1
    %p68 = scmp.eq.s32.totalorder %s9, 1
    %p69 = scmp.ne.s32.totalorder %s64, %s66
    %p70 = scmp.eq.s32.totalorder %s9, 0
    %p71 = por %p69, %p70
    %p72 = scmp.ne.s32.totalorder %s64, %s66
    %p73 = scmp.eq.s32.totalorder %s14, 1
    %p74 = por %p72, %p73
    %p75 = scmp.ne.s32.totalorder %s66, %s67
    %p76 = scmp.eq.s32.totalorder %s14, 0
    %p77 = por %p75, %p76
    %p78 = scmp.ne.s32.totalorder %s66, %s67
    %p79 = scmp.eq.s32.totalorder %s15, 1
    %p80 = por %p78, %p79
    %p82 = scmp.ne.s32.totalorder %s67, %s81
    %p83 = scmp.eq.s32.totalorder %s15, 0
    %p84 = por %p82, %p83
    %s85 = ssub.s32 %s9, %s16
    %p86 = scmp.eq.s32.totalorder %s85, 0
    %s88 = sadd.s32 %s87, 1
    %s89 = scalar_select %p86, %s87, %s88
    %p92 = pneg %p86
    %p93 = scmp.eq.s32.totalorder %s9, 1
    %p94 = por %p92, %p93
    %p95 = scmp.ne.s32.totalorder %s87, %s90
    %p96 = scmp.eq.s32.totalorder %s9, 0
    %p97 = por %p95, %p96
    %p98 = scmp.ne.s32.totalorder %s87, %s90
    %p99 = scmp.eq.s32.totalorder %s14, 1
    %p100 = por %p98, %p99
    %p101 = scmp.ne.s32.totalorder %s90, %s91
    %p102 = scmp.eq.s32.totalorder %s14, 0
    %p103 = por %p101, %p102
    %p104 = scmp.ne.s32.totalorder %s90, %s91
    %p105 = scmp.eq.s32.totalorder %s15, 1
    %p106 = por %p104, %p105
    %p108 = scmp.ne.s32.totalorder %s91, %s107
    %p109 = scmp.eq.s32.totalorder %s15, 0
    %p110 = por %p108, %p109
    %p111 = scmp.le.s32.totalorder 1, %s9
    %p112 = scmp.lt.s32.totalorder %s9, 3
    %p113 = pnand %p111, %p112
    %p114 = pneg %p113
    // Predicated region
    $region9: #{inverted_residual_se_block.1} parent=5 // pred_check
      _
    $region10: #{inverted_residual_se_block.1} parent=5 // pred_check_branch
      %116 = sbr.rel (%p113) target = $region12
    $region11: #{inverted_residual_se_block.1} parent=5 // pred_region
      %s117 = ssub.s32 %s9, 1
      // Predicated region
      $region13: #{inverted_residual_se_block.1} parent=11 // pred_check
        %p118 = pneg %p56
      $region14: #{inverted_residual_se_block.1} parent=11 // pred_check_branch
        %120 = sbr.rel (%p118) target = $region16
      $region15: #{inverted_residual_se_block.1} parent=11 // pred_region
        _
      $region16: #{inverted_residual_se_block.1} parent=11 // pred_fallthru
        _
      // Predicated region
      $region17: #{inverted_residual_se_block.1} parent=11 // pred_check
        %p121 = pneg %p77
      $region18: #{inverted_residual_se_block.1} parent=11 // pred_check_branch
        %123 = sbr.rel (%p121) target = $region20
      $region19: #{inverted_residual_se_block.1} parent=11 // pred_region
        _
      $region20: #{inverted_residual_se_block.1} parent=11 // pred_fallthru
        _
    $region12: #{inverted_residual_se_block.1} parent=5 // pred_fallthru
      _
    %p124 = scmp.lt.s32.totalorder %s9, 2
    // Predicated region
    $region21: #{inverted_residual_se_block.1} parent=5 // pred_check
      %p125 = pneg %p124
    $region22: #{inverted_residual_se_block.1} parent=5 // pred_check_branch
      %127 = sbr.rel (%p125) target = $region24
    $region23: #{inverted_residual_se_block.1} parent=5 // pred_region
      // Predicated region
      $region25: #{inverted_residual_se_block.1} parent=23 // pred_check
        %p128 = pneg %p29
      $region26: #{inverted_residual_se_block.1} parent=23 // pred_check_branch
        %130 = sbr.rel (%p128) target = $region28
      $region27: #{inverted_residual_se_block.1} parent=23 // pred_region
        %p131 = scmp.lt.s32.totalorder %s9, 1
        %s132 = scalar_select %p131, %s9, 1
        %s133 = smul.addr %s132, 4
        %s134 = smul.addr %s133, 8
        %s135 = scalar_lea.vmem %s0, %s134
      $region28: #{inverted_residual_se_block.1} parent=23 // pred_fallthru
        _
    $region24: #{inverted_residual_se_block.1} parent=5 // pred_fallthru
      _
    %p136 = scmp.le.s32.totalorder 1, %s9
    %p137 = scmp.lt.s32.totalorder %s9, 3
    %p138 = pnand %p136, %p137
    %p139 = pneg %p138
    // Predicated region
    $region29: #{inverted_residual_se_block.1} parent=5 // pred_check
      _
    $region30: #{inverted_residual_se_block.1} parent=5 // pred_check_branch
      %141 = sbr.rel (%p138) target = $region32
    $region31: #{inverted_residual_se_block.1} parent=5 // pred_region
      %s142 = ssub.s32 %s9, 1
      %p143 = scmp.lt.s32.totalorder %s14, 1
      %s144 = scalar_select %p143, %s14, 1
      %s145 = smul.addr %s144, 4
      %s146 = smul.addr %s145, 8
      %s147 = scalar_lea.vmem %s0, %s146
      %p148 = pneg %p35
      %p149 = pneg %p32
      %p150 = pneg %p56
      %p151 = pneg %p53
      %p152 = pneg %p77
      %p153 = pneg %p74
      %p154 = pneg %p103
      %p155 = pneg %p100
      %p156 = scmp.lt.s32.totalorder %s14, 1
      %s157 = scalar_select %p156, %s14, 1
      %s158 = smul.addr %s157, 2
      %s159 = smul.addr %s158, 8
      %s160 = scalar_lea.vmem %s3, %s159
      %p161 = scmp.lt.s32.totalorder %s14, 1
      %s162 = scalar_select %p161, %s14, 1
      %s163 = smul.addr %s162, 4
      %s164 = smul.addr %s163, 8
      %s165 = scalar_lea.vmem %s0, %s164
      %p166 = scmp.lt.s32.totalorder %s14, 1
      %s167 = scalar_select %p166, %s14, 1
      %s168 = smul.addr %s167, 2
      %s169 = smul.addr %s168, 8
      %s170 = scalar_lea.vmem %s3, %s169
      %v171 = vld [vmem:[%s1] sm:$0xff]
      %v172 = vld [vmem:[%s1 + $0x38] sm:$0xff]
      %v173 = vld [vmem:[%s1 + $0x70] sm:$0xff]
      %v174 = vld [vmem:[%s1 + $0xa8] sm:$0xff]
      %v175 = vld [vmem:[%s1 + $0x8] sm:$0xff]
      %v176 = vld [vmem:[%s1 + $0x40] sm:$0xff]
      %v177 = vld [vmem:[%s1 + $0x78] sm:$0xff]
      %v178 = vld [vmem:[%s1 + $0xb0] sm:$0xff]
      %v179 = vld [vmem:[%s1 + $0x10] sm:$0xff]
      %v180 = vld [vmem:[%s1 + $0x48] sm:$0xff]
      %v181 = vld [vmem:[%s1 + $0x80] sm:$0xff]
      %v182 = vld [vmem:[%s1 + $0xb8] sm:$0xff]
      %v183 = vld [vmem:[%s1 + $0x28] sm:$0xff]
      %v184 = vld [vmem:[%s1 + $0x30] sm:$0xff]
      %v185 = vld [vmem:[%s1 + $0x18] sm:$0xff]
      %v186 = vld [vmem:[%s1 + $0x50] sm:$0xff]
      %v187 = vld [vmem:[%s1 + $0x88] sm:$0xff]
      %v188 = vld [vmem:[%s1 + $0xc0] sm:$0xff]
      %v189 = vld [vmem:[%s1 + $0x20] sm:$0xff]
      %v190 = vld [vmem:[%s1 + $0x58] sm:$0xff]
      %v191 = vld [vmem:[%s1 + $0x90] sm:$0xff]
      %v192 = vld [vmem:[%s1 + $0xc8] sm:$0xff]
      %v193 = vld [vmem:[%s165] sm:$0xff]
      %v194 = vld [vmem:[%s165 + $0x8] sm:$0xff]
      %v195 = vld [vmem:[%s165 + $0x10] sm:$0x1]
      %v196 = vld [vmem:[%s165 + $0x18] sm:$0x1]
      %vm197 = vcmask 72704
      %v199 = vsel %vm197, %v171, 0
      %v202 = vsel %vm197, %v172, 0
      %v205 = vsel %vm197, %v173, 0
      %v208 = vsel %vm197, %v174, 0
      %vm210 = vcmask 1040384
      %v212 = vsel %vm210, %v195, 0
      %v215 = vsel %vm210, %v196, 0
      %217 = vmatpush.msra.mxu0 0.0
      %218 = vmatpush.msra.mxu0 0.0
      %219 = vmatpush.msra.mxu0 0.0
      %220 = vmatpush.msra.mxu0 0.0
      %221 = vmatpush.msra.mxu0 0.0
      %222 = vmatpush.msra.mxu0 0.0
      %223 = vmatpush.msra.mxu0 0.0
      %224 = vmatpush.msra.mxu0 0.0
      %225 = vmatpush.msra.mxu0 0.0
      %226 = vmatpush.msra.mxu0 0.0
      %227 = vmatpush.msra.mxu0 0.0
      %228 = vmatpush.msra.mxu0 0.0
      %229 = vmatpush.msra.mxu0 0.0
      %230 = vmatpush.msra.mxu0 0.0
      %231 = vmatpush.msra.mxu0 %v212
      %232 = vmatpush.msra.mxu0 %v193
      %233 = vmatmul.f32.gmra.mxu0 %v199
      %v234 = vpop.f32.mrf.mxu0
      %v235 = vadd.f32 0.0, %v234
      %236 = vmatmul.f32.gmra.mxu0 %v202
      %v237 = vpop.f32.mrf.mxu0
      %v238 = vadd.f32 0.0, %v237
      %239 = vmatmul.f32.gmra.mxu0 %v205
      %v240 = vpop.f32.mrf.mxu0
      %v241 = vadd.f32 0.0, %v240
      %242 = vmatmul.f32.gmra.mxu0 %v208
      %v243 = vpop.f32.mrf.mxu0
      %v244 = vadd.f32 0.0, %v243
      %245 = vdwg.mxu0
      %246 = vmatpush.msra.mxu0 0.0
      %247 = vmatpush.msra.mxu0 0.0
      %248 = vmatpush.msra.mxu0 0.0
      %249 = vmatpush.msra.mxu0 0.0
      %250 = vmatpush.msra.mxu0 0.0
      %251 = vmatpush.msra.mxu0 0.0
      %252 = vmatpush.msra.mxu0 0.0
      %253 = vmatpush.msra.mxu0 0.0
      %254 = vmatpush.msra.mxu0 0.0
      %255 = vmatpush.msra.mxu0 0.0
      %256 = vmatpush.msra.mxu0 0.0
      %257 = vmatpush.msra.mxu0 0.0
      %258 = vmatpush.msra.mxu0 0.0
      %259 = vmatpush.msra.mxu0 0.0
      %260 = vmatpush.msra.mxu0 %v215
      %261 = vmatpush.msra.mxu0 %v194
      %262 = vmatmul.f32.gmra.mxu0 %v199
      %v263 = vpop.f32.mrf.mxu0
      %v264 = vadd.f32 0.0, %v263
      %265 = vmatmul.f32.gmra.mxu0 %v202
      %v266 = vpop.f32.mrf.mxu0
      %v267 = vadd.f32 0.0, %v266
      %268 = vmatmul.f32.gmra.mxu0 %v205
      %v269 = vpop.f32.mrf.mxu0
      %v270 = vadd.f32 0.0, %v269
      %271 = vmatmul.f32.gmra.mxu0 %v208
      %v272 = vpop.f32.mrf.mxu0
      %v273 = vadd.f32 0.0, %v272
      %274 = vdwg.mxu0
      %v275 = vadd.f32 %v235, 3.0
      %v276 = vadd.f32 %v264, 3.0
      %v277 = vadd.f32 %v238, 3.0
      %v278 = vadd.f32 %v267, 3.0
      %v279 = vadd.f32 %v241, 3.0
      %v280 = vadd.f32 %v270, 3.0
      %v281 = vadd.f32 %v244, 3.0
      %v282 = vadd.f32 %v273, 3.0
      %v283 = vmax.f32 %v275, 0.0
      %v284 = vmax.f32 %v276, 0.0
      %v285 = vmax.f32 %v277, 0.0
      %v286 = vmax.f32 %v278, 0.0
      %v287 = vmax.f32 %v279, 0.0
      %v288 = vmax.f32 %v280, 0.0
      %v289 = vmax.f32 %v281, 0.0
      %v290 = vmax.f32 %v282, 0.0
      %v291 = vmin.f32 %v283, 6.0
      %v292 = vmin.f32 %v284, 6.0
      %v293 = vmin.f32 %v285, 6.0
      %v294 = vmin.f32 %v286, 6.0
      %v295 = vmin.f32 %v287, 6.0
      %v296 = vmin.f32 %v288, 6.0
      %v297 = vmin.f32 %v289, 6.0
      %v298 = vmin.f32 %v290, 6.0
      %v299 = vmul.f32 %v235, %v291
      %v300 = vmul.f32 %v264, %v292
      %v301 = vmul.f32 %v238, %v293
      %v302 = vmul.f32 %v267, %v294
      %v303 = vmul.f32 %v241, %v295
      %v304 = vmul.f32 %v270, %v296
      %v305 = vmul.f32 %v244, %v297
      %v306 = vmul.f32 %v273, %v298
      %v307 = vmul.f32 %v299, 0.16666667
      %v308 = vmul.f32 %v300, 0.16666667
      %v309 = vmul.f32 %v301, 0.16666667
      %v310 = vmul.f32 %v302, 0.16666667
      %v311 = vmul.f32 %v303, 0.16666667
      %v312 = vmul.f32 %v304, 0.16666667
      %v313 = vmul.f32 %v305, 0.16666667
      %v314 = vmul.f32 %v306, 0.16666667
      %316 = vset.pattern.permute.xlu0 4
      %317 = vperm.xlu0 %316, %v175
      %v318 = vpop.permute.xlu0 %317
      %321 = vset.pattern.permute.xlu0 4
      %322 = vperm.xlu0 %321, %v176
      %v323 = vpop.permute.xlu0 %322
      %326 = vset.pattern.permute.xlu0 4
      %327 = vperm.xlu0 %326, %v177
      %v328 = vpop.permute.xlu0 %327
      %331 = vset.pattern.permute.xlu0 4
      %332 = vperm.xlu0 %331, %v178
      %v333 = vpop.permute.xlu0 %332
      %v335 = vmul.f32 %v318, %v307
      %v336 = vmul.f32 %v318, %v308
      %v337 = vmul.f32 %v323, %v309
      %v338 = vmul.f32 %v323, %v310
      %v339 = vmul.f32 %v328, %v311
      %v340 = vmul.f32 %v328, %v312
      %v341 = vmul.f32 %v333, %v313
      %v342 = vmul.f32 %v333, %v314
      %343 = vrot.lane.b32.xlu0 %v307, 17
      %v344 = vpop.permute.xlu0 %343
      %345 = vrot.lane.b32.xlu0 %v309, 17
      %v346 = vpop.permute.xlu0 %345
      %347 = vrot.lane.b32.xlu0 %v311, 17
      %v348 = vpop.permute.xlu0 %347
      %349 = vrot.lane.b32.xlu0 %v313, 17
      %v350 = vpop.permute.xlu0 %349
      %351 = vrot.lane.b32.xlu0 %v308, 17
      %v352 = vpop.permute.xlu0 %351
      %353 = vrot.lane.b32.xlu0 %v310, 17
      %v354 = vpop.permute.xlu0 %353
      %355 = vrot.lane.b32.xlu0 %v312, 17
      %v356 = vpop.permute.xlu0 %355
      %357 = vrot.lane.b32.xlu0 %v314, 17
      %v358 = vpop.permute.xlu0 %357
      %v359 = vlaneseq
      %v360 = vand.u32 %v359, 127
      %vm361 = vcmp.lt.s32.totalorder %v360, 17
      %v362 = vsel %vm361, %v344, %v352
      %v363 = vsel %vm361, %v346, %v354
      %v364 = vsel %vm361, %v348, %v356
      %v365 = vsel %vm361, %v350, %v358
      %v366 = vsel %vm361, %v352, %v344
      %v367 = vsel %vm361, %v354, %v346
      %v368 = vsel %vm361, %v356, %v348
      %v369 = vsel %vm361, %v358, %v350
      %v370 = vld [vmem:[%s2] ss:$8 sm:$0x3]
      %v372 = vperm.slane %v370, 0
      %v373 = vperm.slane %v370, 1
      %v376 = vmul.f32 %v366, %v372
      %v377 = vmul.f32 %v362, %v373
      %v378 = vmul.f32 %v367, %v372
      %v379 = vmul.f32 %v363, %v373
      %v380 = vmul.f32 %v368, %v372
      %v381 = vmul.f32 %v364, %v373
      %v382 = vmul.f32 %v369, %v372
      %v383 = vmul.f32 %v365, %v373
      %384 = vset.pattern.permute.xlu0 0
      %385 = vperm.xlu0 %384, %v175
      %v386 = vpop.permute.xlu0 %385
      %388 = vset.pattern.permute.xlu0 0
      %389 = vperm.xlu0 %388, %v176
      %v390 = vpop.permute.xlu0 %389
      %392 = vset.pattern.permute.xlu0 0
      %393 = vperm.xlu0 %392, %v177
      %v394 = vpop.permute.xlu0 %393
      %396 = vset.pattern.permute.xlu0 0
      %397 = vperm.xlu0 %396, %v178
      %v398 = vpop.permute.xlu0 %397
      %v400 = vmul.f32 %v386, %v376
      %v401 = vmul.f32 %v386, %v377
      %v402 = vmul.f32 %v390, %v378
      %v403 = vmul.f32 %v390, %v379
      %v404 = vmul.f32 %v394, %v380
      %v405 = vmul.f32 %v394, %v381
      %v406 = vmul.f32 %v398, %v382
      %v407 = vmul.f32 %v398, %v383
      %v408 = vadd.f32 %v335, %v400
      %v409 = vadd.f32 %v336, %v401
      %v410 = vadd.f32 %v337, %v402
      %v411 = vadd.f32 %v338, %v403
      %v412 = vadd.f32 %v339, %v404
      %v413 = vadd.f32 %v340, %v405
      %v414 = vadd.f32 %v341, %v406
      %v415 = vadd.f32 %v342, %v407
      %416 = vrot.lane.b32.xlu0 %v307, 16
      %v417 = vpop.permute.xlu0 %416
      %418 = vrot.lane.b32.xlu0 %v309, 16
      %v419 = vpop.permute.xlu0 %418
      %420 = vrot.lane.b32.xlu0 %v311, 16
      %v421 = vpop.permute.xlu0 %420
      %422 = vrot.lane.b32.xlu0 %v313, 16
      %v423 = vpop.permute.xlu0 %422
      %424 = vrot.lane.b32.xlu0 %v308, 16
      %v425 = vpop.permute.xlu0 %424
      %426 = vrot.lane.b32.xlu0 %v310, 16
      %v427 = vpop.permute.xlu0 %426
      %428 = vrot.lane.b32.xlu0 %v312, 16
      %v429 = vpop.permute.xlu0 %428
      %430 = vrot.lane.b32.xlu0 %v314, 16
      %v431 = vpop.permute.xlu0 %430
      %vm432 = vcmp.lt.s32.totalorder %v360, 16
      %v433 = vsel %vm432, %v417, %v425
      %v434 = vsel %vm432, %v419, %v427
      %v435 = vsel %vm432, %v421, %v429
      %v436 = vsel %vm432, %v423, %v431
      %v437 = vsel %vm432, %v425, %v417
      %v438 = vsel %vm432, %v427, %v419
      %v439 = vsel %vm432, %v429, %v421
      %v440 = vsel %vm432, %v431, %v423
      %s441 = scalar_lea.vmem %s2, 1
      %v442 = vld [vmem:[%s441] ss:$8 sm:$0x3]
      %v444 = vperm.slane %v442, 0
      %v445 = vperm.slane %v442, 1
      %v448 = vmul.f32 %v437, %v444
      %v449 = vmul.f32 %v433, %v445
      %v450 = vmul.f32 %v438, %v444
      %v451 = vmul.f32 %v434, %v445
      %v452 = vmul.f32 %v439, %v444
      %v453 = vmul.f32 %v435, %v445
      %v454 = vmul.f32 %v440, %v444
      %v455 = vmul.f32 %v436, %v445
      %456 = vset.pattern.permute.xlu0 1
      %457 = vperm.xlu0 %456, %v175
      %v458 = vpop.permute.xlu0 %457
      %460 = vset.pattern.permute.xlu0 1
      %461 = vperm.xlu0 %460, %v176
      %v462 = vpop.permute.xlu0 %461
      %464 = vset.pattern.permute.xlu0 1
      %465 = vperm.xlu0 %464, %v177
      %v466 = vpop.permute.xlu0 %465
      %468 = vset.pattern.permute.xlu0 1
      %469 = vperm.xlu0 %468, %v178
      %v470 = vpop.permute.xlu0 %469
      %v472 = vmul.f32 %v458, %v448
      %v473 = vmul.f32 %v458, %v449
      %v474 = vmul.f32 %v462, %v450
      %v475 = vmul.f32 %v462, %v451
      %v476 = vmul.f32 %v466, %v452
      %v477 = vmul.f32 %v466, %v453
      %v478 = vmul.f32 %v470, %v454
      %v479 = vmul.f32 %v470, %v455
      %v480 = vadd.f32 %v408, %v472
      %v481 = vadd.f32 %v409, %v473
      %v482 = vadd.f32 %v410, %v474
      %v483 = vadd.f32 %v411, %v475
      %v484 = vadd.f32 %v412, %v476
      %v485 = vadd.f32 %v413, %v477
      %v486 = vadd.f32 %v414, %v478
      %v487 = vadd.f32 %v415, %v479
      %488 = vrot.lane.b32.xlu0 %v307, 15
      %v489 = vpop.permute.xlu0 %488
      %490 = vrot.lane.b32.xlu0 %v309, 15
      %v491 = vpop.permute.xlu0 %490
      %492 = vrot.lane.b32.xlu0 %v311, 15
      %v493 = vpop.permute.xlu0 %492
      %494 = vrot.lane.b32.xlu0 %v313, 15
      %v495 = vpop.permute.xlu0 %494
      %496 = vrot.lane.b32.xlu0 %v308, 15
      %v497 = vpop.permute.xlu0 %496
      %498 = vrot.lane.b32.xlu0 %v310, 15
      %v499 = vpop.permute.xlu0 %498
      %500 = vrot.lane.b32.xlu0 %v312, 15
      %v501 = vpop.permute.xlu0 %500
      %502 = vrot.lane.b32.xlu0 %v314, 15
      %v503 = vpop.permute.xlu0 %502
      %vm504 = vcmp.lt.s32.totalorder %v360, 15
      %v505 = vsel %vm504, %v489, %v497
      %v506 = vsel %vm504, %v491, %v499
      %v507 = vsel %vm504, %v493, %v501
      %v508 = vsel %vm504, %v495, %v503
      %v509 = vsel %vm504, %v497, %v489
      %v510 = vsel %vm504, %v499, %v491
      %v511 = vsel %vm504, %v501, %v493
      %v512 = vsel %vm504, %v503, %v495
      %s513 = scalar_lea.vmem %s2, 2
      %v514 = vld [vmem:[%s513] ss:$8 sm:$0x3]
      %v516 = vperm.slane %v514, 0
      %v517 = vperm.slane %v514, 1
      %v520 = vmul.f32 %v509, %v516
      %v521 = vmul.f32 %v505, %v517
      %v522 = vmul.f32 %v510, %v516
      %v523 = vmul.f32 %v506, %v517
      %v524 = vmul.f32 %v511, %v516
      %v525 = vmul.f32 %v507, %v517
      %v526 = vmul.f32 %v512, %v516
      %v527 = vmul.f32 %v508, %v517
      %528 = vset.pattern.permute.xlu0 2
      %529 = vperm.xlu0 %528, %v175
      %v530 = vpop.permute.xlu0 %529
      %532 = vset.pattern.permute.xlu0 2
      %533 = vperm.xlu0 %532, %v176
      %v534 = vpop.permute.xlu0 %533
      %536 = vset.pattern.permute.xlu0 2
      %537 = vperm.xlu0 %536, %v177
      %v538 = vpop.permute.xlu0 %537
      %540 = vset.pattern.permute.xlu0 2
      %541 = vperm.xlu0 %540, %v178
      %v542 = vpop.permute.xlu0 %541
      %v544 = vmul.f32 %v530, %v520
      %v545 = vmul.f32 %v530, %v521
      %v546 = vmul.f32 %v534, %v522
      %v547 = vmul.f32 %v534, %v523
      %v548 = vmul.f32 %v538, %v524
      %v549 = vmul.f32 %v538, %v525
      %v550 = vmul.f32 %v542, %v526
      %v551 = vmul.f32 %v542, %v527
      %v552 = vadd.f32 %v480, %v544
      %v553 = vadd.f32 %v481, %v545
      %v554 = vadd.f32 %v482, %v546
      %v555 = vadd.f32 %v483, %v547
      %v556 = vadd.f32 %v484, %v548
      %v557 = vadd.f32 %v485, %v549
      %v558 = vadd.f32 %v486, %v550
      %v559 = vadd.f32 %v487, %v551
      %560 = vrot.lane.b32.xlu0 %v307, 1
      %v561 = vpop.permute.xlu0 %560
      %562 = vrot.lane.b32.xlu0 %v309, 1
      %v563 = vpop.permute.xlu0 %562
      %564 = vrot.lane.b32.xlu0 %v311, 1
      %v565 = vpop.permute.xlu0 %564
      %566 = vrot.lane.b32.xlu0 %v313, 1
      %v567 = vpop.permute.xlu0 %566
      %568 = vrot.lane.b32.xlu0 %v308, 1
      %v569 = vpop.permute.xlu0 %568
      %570 = vrot.lane.b32.xlu0 %v310, 1
      %v571 = vpop.permute.xlu0 %570
      %572 = vrot.lane.b32.xlu0 %v312, 1
      %v573 = vpop.permute.xlu0 %572
      %574 = vrot.lane.b32.xlu0 %v314, 1
      %v575 = vpop.permute.xlu0 %574
      %vm576 = vcmp.lt.s32.totalorder %v360, 1
      %v577 = vsel %vm576, %v561, %v569
      %v578 = vsel %vm576, %v563, %v571
      %v579 = vsel %vm576, %v565, %v573
      %v580 = vsel %vm576, %v567, %v575
      %v581 = vsel %vm576, %v569, %v561
      %v582 = vsel %vm576, %v571, %v563
      %v583 = vsel %vm576, %v573, %v565
      %v584 = vsel %vm576, %v575, %v567
      %s585 = scalar_lea.vmem %s2, 3
      %v586 = vld [vmem:[%s585] ss:$8 sm:$0x3]
      %v588 = vperm.slane %v586, 0
      %v589 = vperm.slane %v586, 1
      %v592 = vmul.f32 %v581, %v588
      %v593 = vmul.f32 %v577, %v589
      %v594 = vmul.f32 %v582, %v588
      %v595 = vmul.f32 %v578, %v589
      %v596 = vmul.f32 %v583, %v588
      %v597 = vmul.f32 %v579, %v589
      %v598 = vmul.f32 %v584, %v588
      %v599 = vmul.f32 %v580, %v589
      %600 = vset.pattern.permute.xlu0 3
      %601 = vperm.xlu0 %600, %v175
      %v602 = vpop.permute.xlu0 %601
      %604 = vset.pattern.permute.xlu0 3
      %605 = vperm.xlu0 %604, %v176
      %v606 = vpop.permute.xlu0 %605
      %608 = vset.pattern.permute.xlu0 3
      %609 = vperm.xlu0 %608, %v177
      %v610 = vpop.permute.xlu0 %609
      %612 = vset.pattern.permute.xlu0 3
      %613 = vperm.xlu0 %612, %v178
      %v614 = vpop.permute.xlu0 %613
      %v616 = vmul.f32 %v602, %v592
      %v617 = vmul.f32 %v602, %v593
      %v618 = vmul.f32 %v606, %v594
      %v619 = vmul.f32 %v606, %v595
      %v620 = vmul.f32 %v610, %v596
      %v621 = vmul.f32 %v610, %v597
      %v622 = vmul.f32 %v614, %v598
      %v623 = vmul.f32 %v614, %v599
      %v624 = vadd.f32 %v552, %v616
      %v625 = vadd.f32 %v553, %v617
      %v626 = vadd.f32 %v554, %v618
      %v627 = vadd.f32 %v555, %v619
      %v628 = vadd.f32 %v556, %v620
      %v629 = vadd.f32 %v557, %v621
      %v630 = vadd.f32 %v558, %v622
      %v631 = vadd.f32 %v559, %v623
      %632 = vrot.lane.b32.xlu0 %v307, 127
      %v633 = vpop.permute.xlu0 %632
      %634 = vrot.lane.b32.xlu0 %v309, 127
      %v635 = vpop.permute.xlu0 %634
      %636 = vrot.lane.b32.xlu0 %v311, 127
      %v637 = vpop.permute.xlu0 %636
      %638 = vrot.lane.b32.xlu0 %v313, 127
      %v639 = vpop.permute.xlu0 %638
      %640 = vrot.lane.b32.xlu0 %v308, 127
      %v641 = vpop.permute.xlu0 %640
      %642 = vrot.lane.b32.xlu0 %v310, 127
      %v643 = vpop.permute.xlu0 %642
      %644 = vrot.lane.b32.xlu0 %v312, 127
      %v645 = vpop.permute.xlu0 %644
      %646 = vrot.lane.b32.xlu0 %v314, 127
      %v647 = vpop.permute.xlu0 %646
      %vm648 = vcmp.lt.s32.totalorder %v360, 127
      %v649 = vsel %vm648, %v633, %v641
      %v650 = vsel %vm648, %v635, %v643
      %v651 = vsel %vm648, %v637, %v645
      %v652 = vsel %vm648, %v639, %v647
      %v653 = vsel %vm648, %v641, %v633
      %v654 = vsel %vm648, %v643, %v635
      %v655 = vsel %vm648, %v645, %v637
      %v656 = vsel %vm648, %v647, %v639
      %s657 = scalar_lea.vmem %s2, 5
      %v658 = vld [vmem:[%s657] ss:$8 sm:$0x3]
      %v660 = vperm.slane %v658, 0
      %v661 = vperm.slane %v658, 1
      %v664 = vmul.f32 %v649, %v660
      %v665 = vmul.f32 %v653, %v661
      %v666 = vmul.f32 %v650, %v660
      %v667 = vmul.f32 %v654, %v661
      %v668 = vmul.f32 %v651, %v660
      %v669 = vmul.f32 %v655, %v661
      %v670 = vmul.f32 %v652, %v660
      %v671 = vmul.f32 %v656, %v661
      %672 = vset.pattern.permute.xlu0 5
      %673 = vperm.xlu0 %672, %v175
      %v674 = vpop.permute.xlu0 %673
      %676 = vset.pattern.permute.xlu0 5
      %677 = vperm.xlu0 %676, %v176
      %v678 = vpop.permute.xlu0 %677
      %680 = vset.pattern.permute.xlu0 5
      %681 = vperm.xlu0 %680, %v177
      %v682 = vpop.permute.xlu0 %681
      %684 = vset.pattern.permute.xlu0 5
      %685 = vperm.xlu0 %684, %v178
      %v686 = vpop.permute.xlu0 %685
      %v688 = vmul.f32 %v674, %v664
      %v689 = vmul.f32 %v674, %v665
      %v690 = vmul.f32 %v678, %v666
      %v691 = vmul.f32 %v678, %v667
      %v692 = vmul.f32 %v682, %v668
      %v693 = vmul.f32 %v682, %v669
      %v694 = vmul.f32 %v686, %v670
      %v695 = vmul.f32 %v686, %v671
      %v696 = vadd.f32 %v624, %v688
      %v697 = vadd.f32 %v625, %v689
      %v698 = vadd.f32 %v626, %v690
      %v699 = vadd.f32 %v627, %v691
      %v700 = vadd.f32 %v628, %v692
      %v701 = vadd.f32 %v629, %v693
      %v702 = vadd.f32 %v630, %v694
      %v703 = vadd.f32 %v631, %v695
      %704 = vrot.lane.b32.xlu0 %v307, 113
      %v705 = vpop.permute.xlu0 %704
      %706 = vrot.lane.b32.xlu0 %v309, 113
      %v707 = vpop.permute.xlu0 %706
      %708 = vrot.lane.b32.xlu0 %v311, 113
      %v709 = vpop.permute.xlu0 %708
      %710 = vrot.lane.b32.xlu0 %v313, 113
      %v711 = vpop.permute.xlu0 %710
      %712 = vrot.lane.b32.xlu0 %v308, 113
      %v713 = vpop.permute.xlu0 %712
      %714 = vrot.lane.b32.xlu0 %v310, 113
      %v715 = vpop.permute.xlu0 %714
      %716 = vrot.lane.b32.xlu0 %v312, 113
      %v717 = vpop.permute.xlu0 %716
      %718 = vrot.lane.b32.xlu0 %v314, 113
      %v719 = vpop.permute.xlu0 %718
      %vm720 = vcmp.lt.s32.totalorder %v360, 113
      %v721 = vsel %vm720, %v705, %v713
      %v722 = vsel %vm720, %v707, %v715
      %v723 = vsel %vm720, %v709, %v717
      %v724 = vsel %vm720, %v711, %v719
      %v725 = vsel %vm720, %v713, %v705
      %v726 = vsel %vm720, %v715, %v707
      %v727 = vsel %vm720, %v717, %v709
      %v728 = vsel %vm720, %v719, %v711
      %s729 = scalar_lea.vmem %s2, 6
      %v730 = vld [vmem:[%s729] ss:$8 sm:$0x3]
      %v732 = vperm.slane %v730, 0
      %v733 = vperm.slane %v730, 1
      %v736 = vmul.f32 %v721, %v732
      %v737 = vmul.f32 %v725, %v733
      %v738 = vmul.f32 %v722, %v732
      %v739 = vmul.f32 %v726, %v733
      %v740 = vmul.f32 %v723, %v732
      %v741 = vmul.f32 %v727, %v733
      %v742 = vmul.f32 %v724, %v732
      %v743 = vmul.f32 %v728, %v733
      %744 = vset.pattern.permute.xlu0 6
      %745 = vperm.xlu0 %744, %v175
      %v746 = vpop.permute.xlu0 %745
      %748 = vset.pattern.permute.xlu0 6
      %749 = vperm.xlu0 %748, %v176
      %v750 = vpop.permute.xlu0 %749
      %752 = vset.pattern.permute.xlu0 6
      %753 = vperm.xlu0 %752, %v177
      %v754 = vpop.permute.xlu0 %753
      %756 = vset.pattern.permute.xlu0 6
      %757 = vperm.xlu0 %756, %v178
      %v758 = vpop.permute.xlu0 %757
      %v760 = vmul.f32 %v746, %v736
      %v761 = vmul.f32 %v746, %v737
      %v762 = vmul.f32 %v750, %v738
      %v763 = vmul.f32 %v750, %v739
      %v764 = vmul.f32 %v754, %v740
      %v765 = vmul.f32 %v754, %v741
      %v766 = vmul.f32 %v758, %v742
      %v767 = vmul.f32 %v758, %v743
      %v768 = vadd.f32 %v696, %v760
      %v769 = vadd.f32 %v697, %v761
      %v770 = vadd.f32 %v698, %v762
      %v771 = vadd.f32 %v699, %v763
      %v772 = vadd.f32 %v700, %v764
      %v773 = vadd.f32 %v701, %v765
      %v774 = vadd.f32 %v702, %v766
      %v775 = vadd.f32 %v703, %v767
      %776 = vrot.lane.b32.xlu0 %v307, 112
      %v777 = vpop.permute.xlu0 %776
      %778 = vrot.lane.b32.xlu0 %v309, 112
      %v779 = vpop.permute.xlu0 %778
      %780 = vrot.lane.b32.xlu0 %v311, 112
      %v781 = vpop.permute.xlu0 %780
      %782 = vrot.lane.b32.xlu0 %v313, 112
      %v783 = vpop.permute.xlu0 %782
      %784 = vrot.lane.b32.xlu0 %v308, 112
      %v785 = vpop.permute.xlu0 %784
      %786 = vrot.lane.b32.xlu0 %v310, 112
      %v787 = vpop.permute.xlu0 %786
      %788 = vrot.lane.b32.xlu0 %v312, 112
      %v789 = vpop.permute.xlu0 %788
      %790 = vrot.lane.b32.xlu0 %v314, 112
      %v791 = vpop.permute.xlu0 %790
      %vm792 = vcmp.lt.s32.totalorder %v360, 112
      %v793 = vsel %vm792, %v777, %v785
      %v794 = vsel %vm792, %v779, %v787
      %v795 = vsel %vm792, %v781, %v789
      %v796 = vsel %vm792, %v783, %v791
      %v797 = vsel %vm792, %v785, %v777
      %v798 = vsel %vm792, %v787, %v779
      %v799 = vsel %vm792, %v789, %v781
      %v800 = vsel %vm792, %v791, %v783
      %s801 = scalar_lea.vmem %s2, 7
      %v802 = vld [vmem:[%s801] ss:$8 sm:$0x3]
      %v804 = vperm.slane %v802, 0
      %v805 = vperm.slane %v802, 1
      %v808 = vmul.f32 %v793, %v804
      %v809 = vmul.f32 %v797, %v805
      %v810 = vmul.f32 %v794, %v804
      %v811 = vmul.f32 %v798, %v805
      %v812 = vmul.f32 %v795, %v804
      %v813 = vmul.f32 %v799, %v805
      %v814 = vmul.f32 %v796, %v804
      %v815 = vmul.f32 %v800, %v805
      %816 = vset.pattern.permute.xlu0 7
      %817 = vperm.xlu0 %816, %v175
      %v818 = vpop.permute.xlu0 %817
      %820 = vset.pattern.permute.xlu0 7
      %821 = vperm.xlu0 %820, %v176
      %v822 = vpop.permute.xlu0 %821
      %824 = vset.pattern.permute.xlu0 7
      %825 = vperm.xlu0 %824, %v177
      %v826 = vpop.permute.xlu0 %825
      %828 = vset.pattern.permute.xlu0 7
      %829 = vperm.xlu0 %828, %v178
      %v830 = vpop.permute.xlu0 %829
      %v832 = vmul.f32 %v818, %v808
      %v833 = vmul.f32 %v818, %v809
      %v834 = vmul.f32 %v822, %v810
      %v835 = vmul.f32 %v822, %v811
      %v836 = vmul.f32 %v826, %v812
      %v837 = vmul.f32 %v826, %v813
      %v838 = vmul.f32 %v830, %v814
      %v839 = vmul.f32 %v830, %v815
      %v840 = vadd.f32 %v768, %v832
      %v841 = vadd.f32 %v769, %v833
      %v842 = vadd.f32 %v770, %v834
      %v843 = vadd.f32 %v771, %v835
      %v844 = vadd.f32 %v772, %v836
      %v845 = vadd.f32 %v773, %v837
      %v846 = vadd.f32 %v774, %v838
      %v847 = vadd.f32 %v775, %v839
      %848 = vrot.lane.b32.xlu0 %v307, 111
      %v849 = vpop.permute.xlu0 %848
      %850 = vrot.lane.b32.xlu0 %v309, 111
      %v851 = vpop.permute.xlu0 %850
      %852 = vrot.lane.b32.xlu0 %v311, 111
      %v853 = vpop.permute.xlu0 %852
      %854 = vrot.lane.b32.xlu0 %v313, 111
      %v855 = vpop.permute.xlu0 %854
      %856 = vrot.lane.b32.xlu0 %v308, 111
      %v857 = vpop.permute.xlu0 %856
      %858 = vrot.lane.b32.xlu0 %v310, 111
      %v859 = vpop.permute.xlu0 %858
      %860 = vrot.lane.b32.xlu0 %v312, 111
      %v861 = vpop.permute.xlu0 %860
      %862 = vrot.lane.b32.xlu0 %v314, 111
      %v863 = vpop.permute.xlu0 %862
      %vm864 = vcmp.lt.s32.totalorder %v360, 111
      %v865 = vsel %vm864, %v849, %v857
      %v866 = vsel %vm864, %v851, %v859
      %v867 = vsel %vm864, %v853, %v861
      %v868 = vsel %vm864, %v855, %v863
      %v869 = vsel %vm864, %v857, %v849
      %v870 = vsel %vm864, %v859, %v851
      %v871 = vsel %vm864, %v861, %v853
      %v872 = vsel %vm864, %v863, %v855
      %s873 = scalar_lea.vmem %s2, 16
      %v874 = vld [vmem:[%s873] ss:$8 sm:$0x3]
      %v876 = vperm.slane %v874, 0
      %v877 = vperm.slane %v874, 1
      %v880 = vmul.f32 %v865, %v876
      %v881 = vmul.f32 %v869, %v877
      %v882 = vmul.f32 %v866, %v876
      %v883 = vmul.f32 %v870, %v877
      %v884 = vmul.f32 %v867, %v876
      %v885 = vmul.f32 %v871, %v877
      %v886 = vmul.f32 %v868, %v876
      %v887 = vmul.f32 %v872, %v877
      %888 = vset.pattern.permute.xlu0 8
      %889 = vperm.xlu0 %888, %v175
      %v890 = vpop.permute.xlu0 %889
      %892 = vset.pattern.permute.xlu0 8
      %893 = vperm.xlu0 %892, %v176
      %v894 = vpop.permute.xlu0 %893
      %896 = vset.pattern.permute.xlu0 8
      %897 = vperm.xlu0 %896, %v177
      %v898 = vpop.permute.xlu0 %897
      %900 = vset.pattern.permute.xlu0 8
      %901 = vperm.xlu0 %900, %v178
      %v902 = vpop.permute.xlu0 %901
      %v904 = vmul.f32 %v890, %v880
      %v905 = vmul.f32 %v890, %v881
      %v906 = vmul.f32 %v894, %v882
      %v907 = vmul.f32 %v894, %v883
      %v908 = vmul.f32 %v898, %v884
      %v909 = vmul.f32 %v898, %v885
      %v910 = vmul.f32 %v902, %v886
      %v911 = vmul.f32 %v902, %v887
      %v912 = vadd.f32 %v840, %v904
      %v913 = vadd.f32 %v841, %v905
      %v914 = vadd.f32 %v842, %v906
      %v915 = vadd.f32 %v843, %v907
      %v916 = vadd.f32 %v844, %v908
      %v917 = vadd.f32 %v845, %v909
      %v918 = vadd.f32 %v846, %v910
      %v919 = vadd.f32 %v847, %v911
      %921 = vset.pattern.permute.xlu0 0
      %922 = vperm.xlu0 %921, %v179
      %v923 = vpop.permute.xlu0 %922
      %926 = vset.pattern.permute.xlu0 0
      %927 = vperm.xlu0 %926, %v180
      %v928 = vpop.permute.xlu0 %927
      %931 = vset.pattern.permute.xlu0 0
      %932 = vperm.xlu0 %931, %v181
      %v933 = vpop.permute.xlu0 %932
      %936 = vset.pattern.permute.xlu0 0
      %937 = vperm.xlu0 %936, %v182
      %v938 = vpop.permute.xlu0 %937
      %v940 = vadd.f32 %v912, %v923
      %v941 = vadd.f32 %v913, %v923
      %v942 = vadd.f32 %v914, %v928
      %v943 = vadd.f32 %v915, %v928
      %v944 = vadd.f32 %v916, %v933
      %v945 = vadd.f32 %v917, %v933
      %v946 = vadd.f32 %v918, %v938
      %v947 = vadd.f32 %v919, %v938
      %v948 = vadd.f32 %v940, 3.0
      %v949 = vadd.f32 %v941, 3.0
      %v950 = vadd.f32 %v942, 3.0
      %v951 = vadd.f32 %v943, 3.0
      %v952 = vadd.f32 %v944, 3.0
      %v953 = vadd.f32 %v945, 3.0
      %v954 = vadd.f32 %v946, 3.0
      %v955 = vadd.f32 %v947, 3.0
      %v956 = vmax.f32 %v948, 0.0
      %v957 = vmax.f32 %v949, 0.0
      %v958 = vmax.f32 %v950, 0.0
      %v959 = vmax.f32 %v951, 0.0
      %v960 = vmax.f32 %v952, 0.0
      %v961 = vmax.f32 %v953, 0.0
      %v962 = vmax.f32 %v954, 0.0
      %v963 = vmax.f32 %v955, 0.0
      %v964 = vmin.f32 %v956, 6.0
      %v965 = vmin.f32 %v957, 6.0
      %v966 = vmin.f32 %v958, 6.0
      %v967 = vmin.f32 %v959, 6.0
      %v968 = vmin.f32 %v960, 6.0
      %v969 = vmin.f32 %v961, 6.0
      %v970 = vmin.f32 %v962, 6.0
      %v971 = vmin.f32 %v963, 6.0
      %v972 = vmul.f32 %v940, %v964
      %v973 = vmul.f32 %v941, %v965
      %v974 = vmul.f32 %v942, %v966
      %v975 = vmul.f32 %v943, %v967
      %v976 = vmul.f32 %v944, %v968
      %v977 = vmul.f32 %v945, %v969
      %v978 = vmul.f32 %v946, %v970
      %v979 = vmul.f32 %v947, %v971
      %v980 = vmul.f32 %v972, 0.16666667
      %v981 = vmul.f32 %v973, 0.16666667
      %v982 = vmul.f32 %v974, 0.16666667
      %v983 = vmul.f32 %v975, 0.16666667
      %v984 = vmul.f32 %v976, 0.16666667
      %v985 = vmul.f32 %v977, 0.16666667
      %v986 = vmul.f32 %v978, 0.16666667
      %v987 = vmul.f32 %v979, 0.16666667
      %v988 = vadd.f32 %v980, %v981
      %989 = vadd.xlane.f32.xlu0 %v988
      %v990 = vpop.xlane.xlu0 %989
      %v991 = vadd.f32 %v982, %v983
      %992 = vadd.xlane.f32.xlu0 %v991
      %v993 = vpop.xlane.xlu0 %992
      %v994 = vadd.f32 %v984, %v985
      %995 = vadd.xlane.f32.xlu0 %v994
      %v996 = vpop.xlane.xlu0 %995
      %v997 = vadd.f32 %v986, %v987
      %998 = vadd.xlane.f32.xlu0 %v997
      %v999 = vpop.xlane.xlu0 %998
      %v1000 = vrcp.pop 256.0
      %v1001 = vmul.f32 256.0, %v1000
      %v1002 = vsub.f32 1.0, %v1001
      %v1003 = vmul.f32 %v1000, %v1002
      %v1004 = vadd.f32 %v1000, %v1003
      %vm1005 = vweird.f32 %v1000
      %v1006 = vsel %vm1005, %v1000, %v1004
      %v1007 = vmul.f32 %v990, %v1006
      %v1008 = vmul.f32 %v993, %v1006
      %v1009 = vmul.f32 %v996, %v1006
      %v1010 = vmul.f32 %v999, %v1006
      %v1011 = vmul.f32 %v185, %v1007
      %v1012 = vmul.f32 %v186, %v1008
      %v1013 = vmul.f32 %v187, %v1009
      %v1014 = vmul.f32 %v188, %v1010
      %vm1015 = vcmask 15360
      %v1016 = vsel %vm1015, %v1011, 0.0
      %v1017 = vsel %vm1015, %v1012, 0.0
      %v1018 = vadd.f32 %v1016, %v1017
      %v1019 = vsel %vm1015, %v1013, 0.0
      %v1020 = vadd.f32 %v1018, %v1019
      %v1021 = vsel %vm1015, %v1014, 0.0
      %v1022 = vadd.f32 %v1020, %v1021
      %v1023 = vrot.slane %v1022, 4
      %v1024 = vadd.f32 %v1022, %v1023
      %v1025 = vrot.slane %v1024, 2
      %v1026 = vadd.f32 %v1024, %v1025
      %v1027 = vrot.slane %v1026, 1
      %v1028 = vadd.f32 %v1026, %v1027
      %v1029 = vmax.f32 %v1028, 0.0
      %v1030 = vmul.f32 %v189, %v1029
      %v1031 = vmul.f32 %v190, %v1029
      %v1032 = vmul.f32 %v191, %v1029
      %v1033 = vmul.f32 %v192, %v1029
      %v1034 = vsel %vm1015, %v1030, 0.0
      %1035 = vadd.xlane.f32.xlu0 %v1034
      %v1036 = vpop.xlane.xlu0 %1035
      %v1037 = vsel %vm1015, %v1031, 0.0
      %1038 = vadd.xlane.f32.xlu0 %v1037
      %v1039 = vpop.xlane.xlu0 %1038
      %v1040 = vsel %vm1015, %v1032, 0.0
      %1041 = vadd.xlane.f32.xlu0 %v1040
      %v1042 = vpop.xlane.xlu0 %1041
      %v1043 = vsel %vm1015, %v1033, 0.0
      %1044 = vadd.xlane.f32.xlu0 %v1043
      %v1045 = vpop.xlane.xlu0 %1044
      %v1046 = vxor.u32 %v1036, 2147483648
      %v1047 = vxor.u32 %v1039, 2147483648
      %v1048 = vxor.u32 %v1042, 2147483648
      %v1049 = vxor.u32 %v1045, 2147483648
      %v1050 = vmul.f32 %v1046, 1.442695
      %v1051 = vpow.pop %v1050
      %v1052 = vmul.f32 %v1047, 1.442695
      %v1053 = vpow.pop %v1052
      %v1054 = vmul.f32 %v1048, 1.442695
      %v1055 = vpow.pop %v1054
      %v1056 = vmul.f32 %v1049, 1.442695
      %v1057 = vpow.pop %v1056
      %v1058 = vadd.f32 %v1051, 1.0
      %v1059 = vadd.f32 %v1053, 1.0
      %v1060 = vadd.f32 %v1055, 1.0
      %v1061 = vadd.f32 %v1057, 1.0
      %v1062 = vrcp.pop %v1058
      %v1063 = vmul.f32 %v1058, %v1062
      %v1064 = vsub.f32 1.0, %v1063
      %v1065 = vmul.f32 %v1062, %v1064
      %v1066 = vadd.f32 %v1062, %v1065
      %vm1067 = vweird.f32 %v1058
      %vm1068 = vweird.f32 %v1062
      %vm1069 = vmor %vm1067, %vm1068
      %v1070 = vsel %vm1069, %v1062, %v1066
      %v1071 = vand.u32 2147483647, %v1058
      %vm1072 = vcmp.eq.f32.partialorder %v1071, 8.507059e+37
      %v1073 = vand.u32 %v1058, 2147483648
      %v1074 = vor.u32 1.1754944e-38, %v1073
      %v1075 = vsel %vm1072, %v1074, %v1070
      %v1076 = vmul.f32 1.0, %v1075
      %v1077 = vrcp.pop %v1059
      %v1078 = vmul.f32 %v1059, %v1077
      %v1079 = vsub.f32 1.0, %v1078
      %v1080 = vmul.f32 %v1077, %v1079
      %v1081 = vadd.f32 %v1077, %v1080
      %vm1082 = vweird.f32 %v1059
      %vm1083 = vweird.f32 %v1077
      %vm1084 = vmor %vm1082, %vm1083
      %v1085 = vsel %vm1084, %v1077, %v1081
      %v1086 = vand.u32 2147483647, %v1059
      %vm1087 = vcmp.eq.f32.partialorder %v1086, 8.507059e+37
      %v1088 = vand.u32 %v1059, 2147483648
      %v1089 = vor.u32 1.1754944e-38, %v1088
      %v1090 = vsel %vm1087, %v1089, %v1085
      %v1091 = vmul.f32 1.0, %v1090
      %v1092 = vrcp.pop %v1060
      %v1093 = vmul.f32 %v1060, %v1092
      %v1094 = vsub.f32 1.0, %v1093
      %v1095 = vmul.f32 %v1092, %v1094
      %v1096 = vadd.f32 %v1092, %v1095
      %vm1097 = vweird.f32 %v1060
      %vm1098 = vweird.f32 %v1092
      %vm1099 = vmor %vm1097, %vm1098
      %v1100 = vsel %vm1099, %v1092, %v1096
      %v1101 = vand.u32 2147483647, %v1060
      %vm1102 = vcmp.eq.f32.partialorder %v1101, 8.507059e+37
      %v1103 = vand.u32 %v1060, 2147483648
      %v1104 = vor.u32 1.1754944e-38, %v1103
      %v1105 = vsel %vm1102, %v1104, %v1100
      %v1106 = vmul.f32 1.0, %v1105
      %v1107 = vrcp.pop %v1061
      %v1108 = vmul.f32 %v1061, %v1107
      %v1109 = vsub.f32 1.0, %v1108
      %v1110 = vmul.f32 %v1107, %v1109
      %v1111 = vadd.f32 %v1107, %v1110
      %vm1112 = vweird.f32 %v1061
      %vm1113 = vweird.f32 %v1107
      %vm1114 = vmor %vm1112, %vm1113
      %v1115 = vsel %vm1114, %v1107, %v1111
      %v1116 = vand.u32 2147483647, %v1061
      %vm1117 = vcmp.eq.f32.partialorder %v1116, 8.507059e+37
      %v1118 = vand.u32 %v1061, 2147483648
      %v1119 = vor.u32 1.1754944e-38, %v1118
      %v1120 = vsel %vm1117, %v1119, %v1115
      %v1121 = vmul.f32 1.0, %v1120
      %v1122 = vmul.f32 %v980, %v1076
      %v1123 = vmul.f32 %v981, %v1076
      %v1124 = vmul.f32 %v982, %v1091
      %v1125 = vmul.f32 %v983, %v1091
      %v1126 = vmul.f32 %v984, %v1106
      %v1127 = vmul.f32 %v985, %v1106
      %v1128 = vmul.f32 %v986, %v1121
      %v1129 = vmul.f32 %v987, %v1121
      %1131 = vset.pattern.permute.xlu0 0
      %1132 = vperm.xlu0 %1131, %v184
      %v1133 = vpop.permute.xlu0 %1132
      %vm1135 = vcmask 261120
      %v1137 = vsel %vm1135, %v183, 0
      %1139 = vmatpush.msra.mxu0 0.0
      %1140 = vmatpush.msra.mxu0 0.0
      %1141 = vmatpush.msra.mxu0 0.0
      %1142 = vmatpush.msra.mxu0 0.0
      %1143 = vmatpush.msra.mxu0 0.0
      %1144 = vmatpush.msra.mxu0 0.0
      %1145 = vmatpush.msra.mxu0 0.0
      %1146 = vmatpush.msra.mxu0 0.0
      %1147 = vmatpush.msra.mxu0 0.0
      %1148 = vmatpush.msra.mxu0 0.0
      %1149 = vmatpush.msra.mxu0 0.0
      %1150 = vmatpush.msra.mxu0 0.0
      %1151 = vmatpush.msra.mxu0 %v1128
      %1152 = vmatpush.msra.mxu0 %v1126
      %1153 = vmatpush.msra.mxu0 %v1124
      %1154 = vmatpush.msra.mxu0 %v1122
      %1155 = vmatmul.f32.gmra.mxu0 %v1137
      %v1156 = vpop.f32.mrf.mxu0
      %v1157 = vadd.f32 %v1133, %v1156
      %1158 = vdwg.mxu0
      %1159 = vmatpush.msra.mxu0 0.0
      %1160 = vmatpush.msra.mxu0 0.0
      %1161 = vmatpush.msra.mxu0 0.0
      %1162 = vmatpush.msra.mxu0 0.0
      %1163 = vmatpush.msra.mxu0 0.0
      %1164 = vmatpush.msra.mxu0 0.0
      %1165 = vmatpush.msra.mxu0 0.0
      %1166 = vmatpush.msra.mxu0 0.0
      %1167 = vmatpush.msra.mxu0 0.0
      %1168 = vmatpush.msra.mxu0 0.0
      %1169 = vmatpush.msra.mxu0 0.0
      %1170 = vmatpush.msra.mxu0 0.0
      %1171 = vmatpush.msra.mxu0 %v1129
      %1172 = vmatpush.msra.mxu0 %v1127
      %1173 = vmatpush.msra.mxu0 %v1125
      %1174 = vmatpush.msra.mxu0 %v1123
      %1175 = vmatmul.f32.gmra.mxu0 %v1137
      %v1176 = vpop.f32.mrf.mxu0
      %v1177 = vadd.f32 %v1133, %v1176
      %1178 = vdwg.mxu0
      %v1179 = vadd.f32 %v1157, %v193
      %v1180 = vadd.f32 %v1177, %v194
      %1181 = vst [vmem:[%s170] sm:$0xff] %v1179
      %1182 = vst [vmem:[%s170 + $0x8] sm:$0xff] %v1180
      %p1183 = scmp.lt.s32.totalorder %s14, 1
      %s1184 = scalar_select %p1183, %s14, 1
      %s1185 = smul.addr %s1184, 2
      %s1186 = smul.addr %s1185, 8
      %s1187 = scalar_lea.vmem %s3, %s1186
      // Predicated region
      $region33: #{inverted_residual_se_block.1} parent=31 // pred_check
        %p1188 = pneg %p100
      $region34: #{inverted_residual_se_block.1} parent=31 // pred_check_branch
        %1190 = sbr.rel (%p1188) target = $region36
      $region35: #{inverted_residual_se_block.1} parent=31 // pred_region
        _
      $region36: #{inverted_residual_se_block.1} parent=31 // pred_fallthru
        _
    $region32: #{inverted_residual_se_block.1} parent=5 // pred_fallthru
      _
    %p1191 = scmp.le.s32.totalorder 2, %s9
    // Predicated region
    $region37: #{inverted_residual_se_block.1} parent=5 // pred_check
      %p1192 = pneg %p1191
    $region38: #{inverted_residual_se_block.1} parent=5 // pred_check_branch
      %1194 = sbr.rel (%p1192) target = $region40
    $region39: #{inverted_residual_se_block.1} parent=5 // pred_region
      %s1195 = ssub.s32 %s9, 2
      // Predicated region
      $region41: #{inverted_residual_se_block.1} parent=39 // pred_check
        %p1196 = pneg %p106
      $region42: #{inverted_residual_se_block.1} parent=39 // pred_check_branch
        %1198 = sbr.rel (%p1196) target = $region44
      $region43: #{inverted_residual_se_block.1} parent=39 // pred_region
        %p1199 = scmp.lt.s32.totalorder %s15, 1
        %s1200 = scalar_select %p1199, %s15, 1
        %s1201 = smul.addr %s1200, 2
        %s1202 = smul.addr %s1201, 8
        %s1203 = scalar_lea.vmem %s3, %s1202
      $region44: #{inverted_residual_se_block.1} parent=39 // pred_fallthru
        _
    $region40: #{inverted_residual_se_block.1} parent=5 // pred_fallthru
      _
  $region6: #{inverted_residual_se_block.1} parent=0 // loop_footer
    %s13 = sadd.s32 1, %s9
  $region7: #{inverted_residual_se_block.1} parent=0 // loop_footer_branch
    %8 = sbr.rel target = $region3
  $region8: #{inverted_residual_se_block.1} parent=0 // loop_exit
    _

</llo_original>
